<compile_context>
chip_gen: v7x
topology: tpu7x:2x2x1
jax: 0.10.0
libtpu: 0.0.40
codegen_flags: <defaults>
</compile_context>

<pallas_src>
import functools
import math

import jax
import jax.numpy as jnp
from jax import lax
from jax.experimental import pallas as pl
from jax.experimental.pallas import tpu as pltpu


# ----------------------------------------------------------------------------- helpers

def _ln_f32(x, g, b, eps):
    mu = jnp.mean(x, axis=-1, keepdims=True)
    var = jnp.mean((x - mu) ** 2, axis=-1, keepdims=True)
    return (x - mu) * lax.rsqrt(var + eps) * g + b


def _bcast1(shape):
    zeros = (0,) * len(shape)
    return pl.BlockSpec(tuple(shape), lambda b: zeros)


def _bcast2(shape):
    zeros = (0,) * len(shape)
    return pl.BlockSpec(tuple(shape), lambda b, l: zeros)


def _layer_spec(shape):
    # Per-layer weight slab: leading dim indexed by the layer grid coordinate.
    zeros = (0,) * len(shape)
    return pl.BlockSpec((1,) + tuple(shape), lambda b, l: (l,) + zeros)


def _pick_batch_tile(B, S, D, hidden):
    # Keep >=2 grid steps on the batch axis (v7x megacore) and cap the f32
    # activation scratch (resid + attn + qkv + fc1 intermediates) per tile.
    per_elem = S * (2 * D + 3 * D + hidden + D) * 4
    budget = 8 << 20
    cap = max(1, min(max(1, B // 2), budget // max(per_elem, 1)))
    bt = 1
    for d in range(1, B + 1):
        if B % d == 0 and d <= cap:
            bt = d
    return bt


# ----------------------------------------------------------------------------- kernels

def _patch_embed_kernel(xp_ref, w_ref, b_ref, pos_ref, cls_ref, o_ref):
    # xp: (1, L, CPP) bf16 | w: (CPP, D) bf16 | b: (1, D) f32
    # pos: (1, L, D) f32 (patch rows of pos_embed) | cls: (1, 1, D) f32
    xp = xp_ref[0]                                                    # (L, CPP) bf16
    tok = jnp.dot(xp, w_ref[...], preferred_element_type=jnp.float32)
    tok = tok + b_ref[...] + pos_ref[0]                               # (L, D) f32
    o_ref[0, 0:1, :] = cls_ref[0].astype(o_ref.dtype)                 # cls row
    o_ref[0, 1:, :] = tok.astype(o_ref.dtype)                         # patch rows


def patch_embed(xp, w, b, pos_patch, cls_row, out_dtype=jnp.float32):
    B, L, CPP = xp.shape
    D = w.shape[1]
    S = L + 1
    return pl.pallas_call(
        _patch_embed_kernel,
        grid=(B,),
        in_specs=[
            pl.BlockSpec((1, L, CPP), lambda b: (b, 0, 0)),
            _bcast1((CPP, D)),
            _bcast1((1, D)),
            _bcast1((1, L, D)),
            _bcast1((1, 1, D)),
        ],
        out_specs=pl.BlockSpec((1, S, D), lambda b: (b, 0, 0)),
        out_shape=jax.ShapeDtypeStruct((B, S, D), out_dtype),
        compiler_params=pltpu.CompilerParams(dimension_semantics=("parallel",)),
    )(xp, w, b, pos_patch, cls_row)


def _blocks_kernel(x_ref,
                   ln1g_ref, ln1b_ref, wqkv_ref, bqkv_ref,
                   projw_ref, projb_ref, ln2g_ref, ln2b_ref,
                   fc1w_ref, fc1b_ref, fc2w_ref, fc2b_ref,
                   normg_ref, normb_ref,
                   out_ref,
                   resid_ref, attn_ref,
                   *, heads, seq, bt, eps):
    f32, bf16 = jnp.float32, jnp.bfloat16
    layer = pl.program_id(1)
    D = x_ref.shape[-1]
    dh = D // heads

    # Load the batch-tile once, keep the residual stream in f32 VMEM scratch.
    @pl.when(layer == 0)
    def _():
        xin = x_ref[...].astype(f32)                                  # (bt, S, D)
        for b in range(bt):
            resid_ref[b * seq:(b + 1) * seq, :] = xin[b]

    x = resid_ref[...]                                                # (bt*S, D) f32

    # ---------------- attention: LN1 -> fused QKV -> per-(batch,head) softmax
    h = _ln_f32(x, ln1g_ref[0], ln1b_ref[0], eps).astype(bf16)
    # One lane-dense (bt*S, D) x (D, 3D) matmul; attention scale already folded
    # into the Q columns of wqkv / bqkv at init time.
    qkv = jnp.dot(h, wqkv_ref[0], preferred_element_type=f32) + bqkv_ref[0]

    for b in range(bt):
        r0 = b * seq
        for hh in range(heads):
            c = hh * dh
            q = qkv[r0:r0 + seq, c:c + dh].astype(bf16)               # (S, dh)
            k = qkv[r0:r0 + seq, D + c:D + c + dh].astype(bf16)
            v = qkv[r0:r0 + seq, 2 * D + c:2 * D + c + dh].astype(bf16)
            s = lax.dot_general(q, k, (((1,), (1,)), ((), ())),
                                preferred_element_type=f32)           # (S, S)
            m = jnp.max(s, axis=-1, keepdims=True)
            p = jnp.exp(s - m)
            denom = jnp.sum(p, axis=-1, keepdims=True)
            p = p * pl.reciprocal(denom, approx=True)
            o = jnp.dot(p.astype(bf16), v, preferred_element_type=f32)  # (S, dh)
            attn_ref[r0:r0 + seq, c:c + dh] = o                       # lane-offset store

    proj = jnp.dot(attn_ref[...].astype(bf16), projw_ref[0],
                   preferred_element_type=f32) + projb_ref[0]
    x = x + proj                                                      # residual (f32, VMEM)

    # ---------------- MLP ------------------------------------------------------
    h2 = _ln_f32(x, ln2g_ref[0], ln2b_ref[0], eps).astype(bf16)
    m1 = jnp.dot(h2, fc1w_ref[0], preferred_element_type=f32) + fc1b_ref[0]
    # exact (erf) GELU in f32 — matches torch.nn.GELU default used by timm Mlp
    m1 = 0.5 * m1 * (1.0 + lax.erf(m1 * (1.0 / math.sqrt(2.0))))
    m2 = jnp.dot(m1.astype(bf16), fc2w_ref[0],
                 preferred_element_type=f32) + fc2b_ref[0]
    x = x + m2
    resid_ref[...] = x

    # ---------------- final LayerNorm + cls extraction (last layer only) -------
    @pl.when(layer == pl.num_programs(1) - 1)
    def _():
        cls = jnp.concatenate([x[b * seq:b * seq + 1, :] for b in range(bt)],
                              axis=0)                                 # (bt, D)
        out_ref[...] = _ln_f32(cls, normg_ref[...], normb_ref[...], eps)[:, None, :]


def vit_blocks(x, params, heads, eps=1e-6):
    B, S, D = x.shape
    depth = params["wqkv"].shape[0]
    hidden = params["fc1_w"].shape[-1]
    bt = _pick_batch_tile(B, S, D, hidden)
    n_bt = B // bt

    # Explicit VMEM budget: double-buffered per-layer weights + activation
    # scratch, clamped to stay well under v7x's 64 MiB / v5e's defaults.
    w_bytes = 2 * (3 * D * D + D * D + 2 * D * hidden)                # bf16 matmul weights
    w_bytes += 4 * (11 * D + hidden)                                  # f32 biases / LN params
    act_bytes = 4 * bt * S * (3 * D + hidden + 4 * D)
    vmem_limit = int(min(48 << 20, max(16 << 20, 3 * w_bytes + 4 * act_bytes + (4 << 20))))

    kernel = functools.partial(_blocks_kernel, heads=heads, seq=S, bt=bt, eps=eps)

    return pl.pallas_call(
        kernel,
        grid=(n_bt, depth),
        in_specs=[
            pl.BlockSpec((bt, S, D), lambda b, l: (b, 0, 0)),         # activations
            _layer_spec((1, D)), _layer_spec((1, D)),                 # ln1 g/b
            _layer_spec((D, 3 * D)), _layer_spec((1, 3 * D)),         # fused qkv w/b
            _layer_spec((D, D)), _layer_spec((1, D)),                 # proj w/b
            _layer_spec((1, D)), _layer_spec((1, D)),                 # ln2 g/b
            _layer_spec((D, hidden)), _layer_spec((1, hidden)),       # fc1 w/b
            _layer_spec((hidden, D)), _layer_spec((1, D)),            # fc2 w/b
            _bcast2((1, D)), _bcast2((1, D)),                         # final norm g/b
        ],
        out_specs=pl.BlockSpec((bt, 1, D), lambda b, l: (b, 0, 0)),
        out_shape=jax.ShapeDtypeStruct((B, 1, D), jnp.float32),
        scratch_shapes=[
            pltpu.VMEM((bt * S, D), jnp.float32),                     # residual stream
            pltpu.VMEM((bt * S, D), jnp.float32),                     # attention output
        ],
        compiler_params=pltpu.CompilerParams(
            dimension_semantics=("parallel", "arbitrary"),
            vmem_limit_bytes=vmem_limit),
    )(x, params["ln1_g"], params["ln1_b"], params["wqkv"], params["bqkv"],
      params["proj_w"], params["proj_b"], params["ln2_g"], params["ln2_b"],
      params["fc1_w"], params["fc1_b"], params["fc2_w"], params["fc2_b"],
      params["norm_g"], params["norm_b"])


# ----------------------------------------------------------------------------- params

# channels == 4 case of the ViT wrapper
NORM_MEAN = (0.485, 0.456, 0.406, 0.5)
NORM_STD = (0.229, 0.224, 0.225, 0.5)


def init_vit_params(key, *, channels, patch, img, embed_dim, depth, heads, mlp_ratio):
    D = embed_dim
    P = patch
    L = (img // patch) ** 2
    hidden = D * mlp_ratio
    dh = D // heads
    scale = dh ** -0.5

    def nrm(k, shape, s=0.02):
        return s * jax.random.normal(k, shape, dtype=jnp.float32)

    keys = jax.random.split(key, 4 + depth)

    # patch-embed conv weight built for 3 channels, zero-padded to `channels`
    # (matches ViT.__init__ when channels == 4).
    w3 = nrm(keys[0], (D, 3, P, P))
    w_extra = jnp.zeros((D, channels - 3, P, P), jnp.float32)
    patch_w_oihw = jnp.concatenate([w3, w_extra], axis=1)              # (D, C, P, P)
    patch_w = patch_w_oihw.reshape(D, channels * P * P).T              # (CPP, D) f32
    patch_b = nrm(keys[1], (D,))

    # Fold input Normalize(mean, std) into the (linear) patch embedding:
    #   W @ ((x - mean) / std) + b  ==  (W / std) @ x + (b - W @ (mean / std))
    mean = jnp.asarray(NORM_MEAN[:channels], jnp.float32)
    std = jnp.asarray(NORM_STD[:channels], jnp.float32)
    inv_std_r = jnp.repeat(1.0 / std, P * P)                           # (CPP,) c,p,q order
    mean_over_std_r = jnp.repeat(mean / std, P * P)
    patch_w_eff = patch_w * inv_std_r[:, None]
    patch_b_eff = patch_b - jnp.sum(patch_w * mean_over_std_r[:, None], axis=0)

    pos_embed = nrm(keys[2], (1, L + 1, D))
    cls_token = nrm(keys[3], (1, 1, D))

    params = {
        "patch_w": patch_w_eff.astype(jnp.bfloat16),                   # (CPP, D)
        "patch_b": patch_b_eff.reshape(1, D),                          # f32
        "pos_patch": pos_embed[:, 1:, :],                              # (1, L, D) f32
        "cls_row": cls_token + pos_embed[:, :1, :],                    # (1, 1, D) f32
        "norm_g": jnp.ones((1, D), jnp.float32),
        "norm_b": jnp.zeros((1, D), jnp.float32),
    }

    # Per-layer weights, stacked on a leading "layer" axis for the depth-fused
    # kernel. Fused QKV kept lane-dense as (D, 3D): column j = which*D + head*dh + d,
    # i.e. torch's qkv.weight.T (timm layout). Attention scale folded into Q.
    names = ["ln1_g", "ln1_b", "wqkv", "bqkv", "proj_w", "proj_b",
             "ln2_g", "ln2_b", "fc1_w", "fc1_b", "fc2_w", "fc2_b"]
    blocks = {k: [] for k in names}
    qscale = jnp.concatenate([jnp.full((D,), scale, jnp.float32),
                              jnp.ones((2 * D,), jnp.float32)])
    for i in range(depth):
        bk = jax.random.split(keys[4 + i], 4)
        wqkv = nrm(bk[0], (D, 3 * D)) * qscale[None, :]
        bqkv = jnp.zeros((3 * D,), jnp.float32) * qscale
        blocks["ln1_g"].append(jnp.ones((1, D), jnp.float32))
        blocks["ln1_b"].append(jnp.zeros((1, D), jnp.float32))
        blocks["wqkv"].append(wqkv.astype(jnp.bfloat16))
        blocks["bqkv"].append(bqkv.reshape(1, 3 * D))
        blocks["proj_w"].append(nrm(bk[1], (D, D)).astype(jnp.bfloat16))
        blocks["proj_b"].append(jnp.zeros((1, D), jnp.float32))
        blocks["ln2_g"].append(jnp.ones((1, D), jnp.float32))
        blocks["ln2_b"].append(jnp.zeros((1, D), jnp.float32))
        blocks["fc1_w"].append(nrm(bk[2], (D, hidden)).astype(jnp.bfloat16))
        blocks["fc1_b"].append(jnp.zeros((1, hidden), jnp.float32))
        blocks["fc2_w"].append(nrm(bk[3], (hidden, D)).astype(jnp.bfloat16))
        blocks["fc2_b"].append(jnp.zeros((1, D), jnp.float32))
    for k in names:
        params[k] = jnp.stack(blocks[k], axis=0)

    cfg = dict(channels=channels, patch=patch, heads=heads)
    return params, cfg


# ----------------------------------------------------------------------------- forward

def vit_forward(params, cfg, x):
    # x: (B, C, H, W) float32, NCHW like PyTorch (raw pixels).
    # TODO(synk): torchvision Resize(256, bicubic) + CenterCrop(224) have no clean
    # Pallas equivalent; input is assumed pre-sized to the model resolution.
    # The Normalize() transform is folded into the patch-embed weights (linear).
    B, C, H, W = x.shape
    P = cfg["patch"]
    Hp, Wp = H // P, W // P
    L = Hp * Wp

    # patchify: strided conv == per-patch matmul; flatten order (c, p, q) matches
    # the conv-weight flatten order. Cast to bf16 BEFORE the relayout so the XLA
    # transpose writes half the bytes.
    xp = (
        x.astype(jnp.bfloat16)
        .reshape(B, C, Hp, P, Wp, P)
        .transpose(0, 2, 4, 1, 3, 5)
        .reshape(B, L, C * P * P)
    )

    tok = patch_embed(xp, params["patch_w"], params["patch_b"],
                      params["pos_patch"], params["cls_row"])          # (B, S, D) f32

    # One depth-fused kernel: residual stays f32 in VMEM; output is already the
    # final-LayerNorm'd cls token (handle_outcome for use_cls_token).
    cls = vit_blocks(tok, params, cfg["heads"])                        # (B, 1, D) f32
    return cls.reshape(B, -1)                                          # (B, D)


# ----------------------------------------------------------------------------- main

if __name__ == "__main__":
    key = jax.random.PRNGKey(0)
    k_param, k_data = jax.random.split(key)

    # small config consistent with the module structure:
    # img=32, patch=8 -> 16 patches (+1 cls), embed_dim=128, depth=2, heads=4, mlp_ratio=4
    params, cfg = init_vit_params(
        k_param, channels=4, patch=8, img=32, embed_dim=128, depth=2, heads=4, mlp_ratio=4
    )

    x = jax.random.uniform(k_data, (2, 4, 32, 32), dtype=jnp.float32)

    out = vit_forward(params, cfg, x)
    out = jax.block_until_ready(out)

    assert out.shape == (2, 128), out.shape
    assert bool(jnp.all(jnp.isfinite(out)))
    print("KERNEL_OK")
</pallas_src>

<mosaic_0001>
module attributes {stable_mosaic.version = 11 : i64} {
  func.func @_patch_embed_kernel(%arg0: i32, %arg1: memref<1x16x256xbf16, #tpu.memory_space<vmem>>, %arg2: memref<256x128xbf16, #tpu.memory_space<vmem>>, %arg3: memref<1x128xf32, #tpu.memory_space<vmem>>, %arg4: memref<1x16x128xf32, #tpu.memory_space<vmem>>, %arg5: memref<1x1x128xf32, #tpu.memory_space<vmem>>, %arg6: memref<1x17x128xf32, #tpu.memory_space<vmem>>) attributes {dimension_semantics = [#tpu.dimension_semantics<parallel>], iteration_bounds = array<i64: 2>, scalar_prefetch = 0 : i64, scratch_operands = 0 : i64, tpu.core_type = #tpu.core_type<tc>, window_params = [{transform_indices = @transform_0, window_bounds = array<i64: 1, 16, 256>}, {pipeline_mode = #tpu.pipeline_mode<synchronous>, transform_indices = @transform_1, window_bounds = array<i64: 256, 128>}, {pipeline_mode = #tpu.pipeline_mode<synchronous>, transform_indices = @transform_2, window_bounds = array<i64: 1, 128>}, {pipeline_mode = #tpu.pipeline_mode<synchronous>, transform_indices = @transform_3, window_bounds = array<i64: 1, 16, 128>}, {pipeline_mode = #tpu.pipeline_mode<synchronous>, transform_indices = @transform_4, window_bounds = array<i64: 1, 1, 128>}, {transform_indices = @transform_5, window_bounds = array<i64: 1, 17, 128>}]} {
    %c0 = arith.constant 0 : index
    %c0_0 = arith.constant 0 : index
    %c0_1 = arith.constant 0 : index
    %0 = vector.load %arg1[%c0, %c0_0, %c0_1] : memref<1x16x256xbf16, #tpu.memory_space<vmem>>, vector<1x16x256xbf16>
    %1 = vector.shape_cast %0 : vector<1x16x256xbf16> to vector<16x256xbf16>
    %c0_2 = arith.constant 0 : index
    %c0_3 = arith.constant 0 : index
    %2 = vector.load %arg2[%c0_2, %c0_3] : memref<256x128xbf16, #tpu.memory_space<vmem>>, vector<256x128xbf16>
    %cst = arith.constant dense<0.000000e+00> : vector<16x128xf32>
    %3 = tpu.matmul %1, %2, %cst {dimension_numbers = #tpu.dot_dimension_numbers<[1], [0], [0], [1], [0, 0, 1, 1], [], []>} : vector<16x256xbf16>, vector<256x128xbf16>, vector<16x128xf32> -> vector<16x128xf32>
    %c0_4 = arith.constant 0 : index
    %c0_5 = arith.constant 0 : index
    %4 = vector.load %arg3[%c0_4, %c0_5] : memref<1x128xf32, #tpu.memory_space<vmem>>, vector<1x128xf32>
    %5 = vector.broadcast %4 : vector<1x128xf32> to vector<16x128xf32>
    %6 = arith.addf %3, %5 : vector<16x128xf32>
    %c0_6 = arith.constant 0 : index
    %c0_7 = arith.constant 0 : index
    %c0_8 = arith.constant 0 : index
    %7 = vector.load %arg4[%c0_6, %c0_7, %c0_8] : memref<1x16x128xf32, #tpu.memory_space<vmem>>, vector<1x16x128xf32>
    %8 = vector.shape_cast %7 : vector<1x16x128xf32> to vector<16x128xf32>
    %9 = arith.addf %6, %8 : vector<16x128xf32>
    %c0_9 = arith.constant 0 : index
    %c0_10 = arith.constant 0 : index
    %c0_11 = arith.constant 0 : index
    %10 = vector.load %arg5[%c0_9, %c0_10, %c0_11] : memref<1x1x128xf32, #tpu.memory_space<vmem>>, vector<1x1x128xf32>
    %11 = vector.shape_cast %10 : vector<1x1x128xf32> to vector<1x128xf32>
    %c0_12 = arith.constant 0 : index
    %c0_13 = arith.constant 0 : index
    %c0_14 = arith.constant 0 : index
    %12 = vector.load %arg6[%c0_12, %c0_13, %c0_14] : memref<1x17x128xf32, #tpu.memory_space<vmem>>, vector<1x1x128xf32>
    %13 = vector.shape_cast %12 : vector<1x1x128xf32> to vector<1x128xf32>
    %14 = vector.shape_cast %11 : vector<1x128xf32> to vector<1x1x128xf32>
    tpu.vector_store %arg6[%c0_12, %c0_13, %c0_14], %14 {strides = array<i32>} : memref<1x17x128xf32, #tpu.memory_space<vmem>>, vector<1x1x128xf32>,
    %c0_15 = arith.constant 0 : index
    %c1 = arith.constant 1 : index
    %c0_16 = arith.constant 0 : index
    %15 = vector.load %arg6[%c0_15, %c1, %c0_16] : memref<1x17x128xf32, #tpu.memory_space<vmem>>, vector<1x16x128xf32>
    %16 = vector.shape_cast %15 : vector<1x16x128xf32> to vector<16x128xf32>
    %17 = vector.shape_cast %9 : vector<16x128xf32> to vector<1x16x128xf32>
    tpu.vector_store %arg6[%c0_15, %c1, %c0_16], %17 {strides = array<i32>} : memref<1x17x128xf32, #tpu.memory_space<vmem>>, vector<1x16x128xf32>,
    return
  }
  func.func @transform_0(%arg0: i32) -> (i32, i32, i32) {
    %c0_i32 = arith.constant 0 : i32
    %c0_i32_0 = arith.constant 0 : i32
    %c0_i32_1 = arith.constant 0 : i32
    return %arg0, %c0_i32, %c0_i32_0 : i32, i32, i32
  }
  func.func @transform_1(%arg0: i32) -> (i32, i32) {
    %c0_i32 = arith.constant 0 : i32
    %c0_i32_0 = arith.constant 0 : i32
    %c0_i32_1 = arith.constant 0 : i32
    return %c0_i32, %c0_i32_0 : i32, i32
  }
  func.func @transform_2(%arg0: i32) -> (i32, i32) {
    %c0_i32 = arith.constant 0 : i32
    %c0_i32_0 = arith.constant 0 : i32
    %c0_i32_1 = arith.constant 0 : i32
    return %c0_i32, %c0_i32_0 : i32, i32
  }
  func.func @transform_3(%arg0: i32) -> (i32, i32, i32) {
    %c0_i32 = arith.constant 0 : i32
    %c0_i32_0 = arith.constant 0 : i32
    %c0_i32_1 = arith.constant 0 : i32
    %c0_i32_2 = arith.constant 0 : i32
    return %c0_i32, %c0_i32_0, %c0_i32_1 : i32, i32, i32
  }
  func.func @transform_4(%arg0: i32) -> (i32, i32, i32) {
    %c0_i32 = arith.constant 0 : i32
    %c0_i32_0 = arith.constant 0 : i32
    %c0_i32_1 = arith.constant 0 : i32
    %c0_i32_2 = arith.constant 0 : i32
    return %c0_i32, %c0_i32_0, %c0_i32_1 : i32, i32, i32
  }
  func.func @transform_5(%arg0: i32) -> (i32, i32, i32) {
    %c0_i32 = arith.constant 0 : i32
    %c0_i32_0 = arith.constant 0 : i32
    %c0_i32_1 = arith.constant 0 : i32
    return %arg0, %c0_i32, %c0_i32_0 : i32, i32, i32
  }
}

</mosaic_0001>

<llo_original>
// kernel: tpu_custom_call.1
$region0: #{tpu_custom_call.1}
  #allocation0 [shape = 'u32[]', space=smem, size = 0x4, offset = 0x4, fixed_abs, tag = 'smem constant byte address 0x4 - core index']
  #allocation1 [shape = 'u32[144,128]{1,0:T(1,128)}', space=vmem, size = 0x12000, scoped, tag = 'internal scratch']
  %s0 = inlined_call_operand.hbm [shape: bf16[2,16,256], index: 0, kind: input, shape index: {}]
  %s1 = inlined_call_operand.hbm [shape: bf16[256,128], index: 1, kind: input, shape index: {}]
  %s2 = inlined_call_operand.vmem [shape: f32[1,128], index: 2, kind: input, shape index: {}]
  %s3 = inlined_call_operand.hbm [shape: f32[1,16,128], index: 3, kind: input, shape index: {}]
  %s4 = inlined_call_operand.vmem [shape: f32[1,1,128], index: 4, kind: input, shape index: {}]
  %s5 = inlined_call_operand.vmem [shape: f32[2,17,128], index: 5, kind: output, shape index: {}]
  %s6 = sld [smem:[#allocation0]]
  $region65: #{tpu_custom_call.1} parent=0
    _
  %s8 = ssub.s32 1, %s6
  %s9 = scalar_select 0, %s8, %s6
  $region1: #{tpu_custom_call.1} parent=0
    #allocation2 [shape = 'u8[16384]{0}', space=vmem, size = 0x4000, scoped, tag = 'input window, operand 0']
    #allocation3 [shape = 's32[2]{0}', space=sflag, size = 0x8, scoped, tag = 'scoped memory for tpu_custom_call.1']
    #allocation4 [shape = 'u8[65536]{0}', space=vmem, size = 0x10000, scoped, tag = 'input window, operand 1, single buffered']
    #allocation5 [shape = 's32[1]{0}', space=sflag, size = 0x4, scoped, tag = 'scoped memory for tpu_custom_call.1']
    #allocation6 [shape = 'u8[8192]{0}', space=vmem, size = 0x2000, scoped, tag = 'input window, operand 3, single buffered']
    %10 = vsyncpa [#allocation3], 0
    %s11 = scalar_lea.sflag [#allocation3], 1
    %12 = vsyncpa %s11, 0
    %13 = vsyncpa [#allocation5], 0
    loop: start=0, step=1, limit=4
    $region2: #{tpu_custom_call.1} parent=1 // loop_pre_header
      _
    $region3: #{tpu_custom_call.1} parent=1 // loop_header
      %s15 = sphi 0, %s19
      %p16 = scmp.ge.s32.totalorder %s15, 4
      %s25 = sphi 0, %s27
      %s28 = sphi 0, %s25
      %s29 = sphi 0, %s28
      %s45 = sphi 0, %s29
      %s49 = sphi 0, %s49
      %s51 = sphi 0, %s49
      %s52 = sphi 0, %s51
      %s66 = sphi 0, %s52
      %s70 = sphi 0, %s70
      %s72 = sphi 0, %s70
      %s73 = sphi 0, %s72
      %s87 = sphi 0, %s73
      %s91 = sphi 0, %s91
      %s93 = sphi 0, %s91
      %s94 = sphi 0, %s93
      %s108 = sphi 0, %s94
      %s112 = sphi 0, %s112
      %s114 = sphi 0, %s112
      %s115 = sphi 0, %s114
      %s129 = sphi 0, %s115
      %s135 = sphi 0, %s137
      %s138 = sphi 0, %s135
      %s139 = sphi 0, %s138
      %s155 = sphi 0, %s139
    $region4: #{tpu_custom_call.1} parent=1 // loop_header_branch
      %18 = sbr.rel (%p16) target = $region8
    $region5: #{tpu_custom_call.1} parent=1 // loop_body
      %s20 = ssub.s32 %s15, 1
      %s21 = ssub.s32 %s15, 2
      %s22 = sadd.s32 %s15, 1
      %s23 = ssub.s32 %s15, %s22
      %p24 = scmp.eq.s32.totalorder %s23, 0
      %s26 = sadd.s32 %s25, 1
      %s27 = scalar_select %p24, %s25, %s26
      %p30 = pneg %p24
      %p31 = scmp.eq.s32.totalorder %s15, 1
      %p32 = por %p30, %p31
      %p33 = scmp.ne.s32.totalorder %s25, %s28
      %p34 = scmp.eq.s32.totalorder %s15, 0
      %p35 = por %p33, %p34
      %p36 = scmp.ne.s32.totalorder %s25, %s28
      %p37 = scmp.eq.s32.totalorder %s20, 1
      %p38 = por %p36, %p37
      %p39 = scmp.ne.s32.totalorder %s28, %s29
      %p40 = scmp.eq.s32.totalorder %s20, 0
      %p41 = por %p39, %p40
      %p42 = scmp.ne.s32.totalorder %s28, %s29
      %p43 = scmp.eq.s32.totalorder %s21, 1
      %p44 = por %p42, %p43
      %p46 = scmp.ne.s32.totalorder %s29, %s45
      %p47 = scmp.eq.s32.totalorder %s21, 0
      %p48 = por %p46, %p47
      %s50 = sadd.s32 %s49, 1
      %p53 = scmp.eq.s32.totalorder %s15, 1
      %p54 = scmp.ne.s32.totalorder %s49, %s51
      %p55 = scmp.eq.s32.totalorder %s15, 0
      %p56 = por %p54, %p55
      %p57 = scmp.ne.s32.totalorder %s49, %s51
      %p58 = scmp.eq.s32.totalorder %s20, 1
      %p59 = por %p57, %p58
      %p60 = scmp.ne.s32.totalorder %s51, %s52
      %p61 = scmp.eq.s32.totalorder %s20, 0
      %p62 = por %p60, %p61
      %p63 = scmp.ne.s32.totalorder %s51, %s52
      %p64 = scmp.eq.s32.totalorder %s21, 1
      %p65 = por %p63, %p64
      %p67 = scmp.ne.s32.totalorder %s52, %s66
      %p68 = scmp.eq.s32.totalorder %s21, 0
      %p69 = por %p67, %p68
      %s71 = sadd.s32 %s70, 1
      %p74 = scmp.eq.s32.totalorder %s15, 1
      %p75 = scmp.ne.s32.totalorder %s70, %s72
      %p76 = scmp.eq.s32.totalorder %s15, 0
      %p77 = por %p75, %p76
      %p78 = scmp.ne.s32.totalorder %s70, %s72
      %p79 = scmp.eq.s32.totalorder %s20, 1
      %p80 = por %p78, %p79
      %p81 = scmp.ne.s32.totalorder %s72, %s73
      %p82 = scmp.eq.s32.totalorder %s20, 0
      %p83 = por %p81, %p82
      %p84 = scmp.ne.s32.totalorder %s72, %s73
      %p85 = scmp.eq.s32.totalorder %s21, 1
      %p86 = por %p84, %p85
      %p88 = scmp.ne.s32.totalorder %s73, %s87
      %p89 = scmp.eq.s32.totalorder %s21, 0
      %p90 = por %p88, %p89
      %s92 = sadd.s32 %s91, 1
      %p95 = scmp.eq.s32.totalorder %s15, 1
      %p96 = scmp.ne.s32.totalorder %s91, %s93
      %p97 = scmp.eq.s32.totalorder %s15, 0
      %p98 = por %p96, %p97
      %p99 = scmp.ne.s32.totalorder %s91, %s93
      %p100 = scmp.eq.s32.totalorder %s20, 1
      %p101 = por %p99, %p100
      %p102 = scmp.ne.s32.totalorder %s93, %s94
      %p103 = scmp.eq.s32.totalorder %s20, 0
      %p104 = por %p102, %p103
      %p105 = scmp.ne.s32.totalorder %s93, %s94
      %p106 = scmp.eq.s32.totalorder %s21, 1
      %p107 = por %p105, %p106
      %p109 = scmp.ne.s32.totalorder %s94, %s108
      %p110 = scmp.eq.s32.totalorder %s21, 0
      %p111 = por %p109, %p110
      %s113 = sadd.s32 %s112, 1
      %p116 = scmp.eq.s32.totalorder %s15, 1
      %p117 = scmp.ne.s32.totalorder %s112, %s114
      %p118 = scmp.eq.s32.totalorder %s15, 0
      %p119 = por %p117, %p118
      %p120 = scmp.ne.s32.totalorder %s112, %s114
      %p121 = scmp.eq.s32.totalorder %s20, 1
      %p122 = por %p120, %p121
      %p123 = scmp.ne.s32.totalorder %s114, %s115
      %p124 = scmp.eq.s32.totalorder %s20, 0
      %p125 = por %p123, %p124
      %p126 = scmp.ne.s32.totalorder %s114, %s115
      %p127 = scmp.eq.s32.totalorder %s21, 1
      %p128 = por %p126, %p127
      %p130 = scmp.ne.s32.totalorder %s115, %s129
      %p131 = scmp.eq.s32.totalorder %s21, 0
      %p132 = por %p130, %p131
      %s133 = ssub.s32 %s15, %s22
      %p134 = scmp.eq.s32.totalorder %s133, 0
      %s136 = sadd.s32 %s135, 1
      %s137 = scalar_select %p134, %s135, %s136
      %p140 = pneg %p134
      %p141 = scmp.eq.s32.totalorder %s15, 1
      %p142 = por %p140, %p141
      %p143 = scmp.ne.s32.totalorder %s135, %s138
      %p144 = scmp.eq.s32.totalorder %s15, 0
      %p145 = por %p143, %p144
      %p146 = scmp.ne.s32.totalorder %s135, %s138
      %p147 = scmp.eq.s32.totalorder %s20, 1
      %p148 = por %p146, %p147
      %p149 = scmp.ne.s32.totalorder %s138, %s139
      %p150 = scmp.eq.s32.totalorder %s20, 0
      %p151 = por %p149, %p150
      %p152 = scmp.ne.s32.totalorder %s138, %s139
      %p153 = scmp.eq.s32.totalorder %s21, 1
      %p154 = por %p152, %p153
      %p156 = scmp.ne.s32.totalorder %s139, %s155
      %p157 = scmp.eq.s32.totalorder %s21, 0
      %p158 = por %p156, %p157
      %p159 = scmp.le.s32.totalorder 1, %s15
      %p160 = scmp.lt.s32.totalorder %s15, 3
      %p161 = pnand %p159, %p160
      %p162 = pneg %p161
      // Predicated region
      $region9: #{tpu_custom_call.1} parent=5 // pred_check
        _
      $region10: #{tpu_custom_call.1} parent=5 // pred_check_branch
        %164 = sbr.rel (%p161) target = $region12
      $region11: #{tpu_custom_call.1} parent=5 // pred_region
        %s165 = ssub.s32 %s15, 1
        // Predicated region
        $region13: #{tpu_custom_call.1} parent=11 // pred_check
          %p166 = pneg %p62
        $region14: #{tpu_custom_call.1} parent=11 // pred_check_branch
          %168 = sbr.rel (%p166) target = $region16
        $region15: #{tpu_custom_call.1} parent=11 // pred_region
          %s170 = ssub.s32 2048, 2048
          %171 = vsyncadd [#allocation5], %s170
          %s172 = sshll.u32 [#allocation4], 4
          %s173 = int_to_ptr.vmem [resolvable:$true] %s172
          %178 = dma.hbm_to_vmem [thread:$0]  %s1, 2048, %s173, [#allocation5], 64, 64, 4
        $region16: #{tpu_custom_call.1} parent=11 // pred_fallthru
          _
        // Predicated region
        $region17: #{tpu_custom_call.1} parent=11 // pred_check
          %p179 = pneg %p83
        $region18: #{tpu_custom_call.1} parent=11 // pred_check_branch
          %181 = sbr.rel (%p179) target = $region20
        $region19: #{tpu_custom_call.1} parent=11 // pred_region
          _
        $region20: #{tpu_custom_call.1} parent=11 // pred_fallthru
          _
        // Predicated region
        $region21: #{tpu_custom_call.1} parent=11 // pred_check
          %p182 = pneg %p104
        $region22: #{tpu_custom_call.1} parent=11 // pred_check_branch
          %184 = sbr.rel (%p182) target = $region24
        $region23: #{tpu_custom_call.1} parent=11 // pred_region
          %s186 = ssub.s32 256, 256
          %187 = vsyncadd [#allocation5], %s186
          %s188 = sshll.u32 [#allocation6], 4
          %s189 = int_to_ptr.vmem [resolvable:$true] %s188
          %194 = dma.hbm_to_vmem [thread:$0]  %s3, 256, %s189, [#allocation5], 128, 128, 8
        $region24: #{tpu_custom_call.1} parent=11 // pred_fallthru
          _
        // Predicated region
        $region25: #{tpu_custom_call.1} parent=11 // pred_check
          %p195 = pneg %p125
        $region26: #{tpu_custom_call.1} parent=11 // pred_check_branch
          %197 = sbr.rel (%p195) target = $region28
        $region27: #{tpu_custom_call.1} parent=11 // pred_region
          _
        $region28: #{tpu_custom_call.1} parent=11 // pred_fallthru
          _
      $region12: #{tpu_custom_call.1} parent=5 // pred_fallthru
        _
      %p198 = scmp.lt.s32.totalorder %s15, 2
      // Predicated region
      $region29: #{tpu_custom_call.1} parent=5 // pred_check
        %p199 = pneg %p198
      $region30: #{tpu_custom_call.1} parent=5 // pred_check_branch
        %201 = sbr.rel (%p199) target = $region32
      $region31: #{tpu_custom_call.1} parent=5 // pred_region
        // Predicated region
        $region33: #{tpu_custom_call.1} parent=31 // pred_check
          %p202 = pneg %p35
        $region34: #{tpu_custom_call.1} parent=31 // pred_check_branch
          %204 = sbr.rel (%p202) target = $region36
        $region35: #{tpu_custom_call.1} parent=31 // pred_region
          %s205 = sand.u32 %s25, 1
          %s206 = scalar_lea.sflag [#allocation3], %s205
          %s207 = sand.u32 %s25, 1
          %s208 = smul.addr %s207, 16
          %s209 = scalar_lea.vmem [#allocation2], %s208
          %s211 = ssub.s32 256, 256
          %212 = vsyncadd %s206, %s211
          %s213 = smul.addr %s15, 4
          %s214 = smul.addr %s213, 64
          %s215 = scalar_lea.hbm %s0, %s214
          %s216 = sshll.u32 %s209, 4
          %s217 = int_to_ptr.vmem [resolvable:$true] %s216
          %222 = dma.hbm_to_vmem [thread:$0]  %s215, 256, %s217, %s206, 128, 128, 8
        $region36: #{tpu_custom_call.1} parent=31 // pred_fallthru
          _
      $region32: #{tpu_custom_call.1} parent=5 // pred_fallthru
        _
      %p223 = scmp.le.s32.totalorder 1, %s15
      %p224 = scmp.lt.s32.totalorder %s15, 3
      %p225 = pnand %p223, %p224
      %p226 = pneg %p225
      // Predicated region
      $region37: #{tpu_custom_call.1} parent=5 // pred_check
        _
      $region38: #{tpu_custom_call.1} parent=5 // pred_check_branch
        %228 = sbr.rel (%p225) target = $region40
      $region39: #{tpu_custom_call.1} parent=5 // pred_region
        %s229 = ssub.s32 %s15, 1
        %s230 = sand.u32 %s28, 1
        %s231 = scalar_lea.sflag [#allocation3], %s230
        %s232 = sand.u32 %s28, 1
        %s233 = smul.addr %s232, 16
        %s234 = scalar_lea.vmem [#allocation2], %s233
        // Predicated region
        $region41: #{tpu_custom_call.1} parent=39 // pred_check
          %p235 = pneg %p41
        $region42: #{tpu_custom_call.1} parent=39 // pred_check_branch
          %237 = sbr.rel (%p235) target = $region44
        $region43: #{tpu_custom_call.1} parent=39 // pred_region
          %238 = dma.done %s231, 256
        $region44: #{tpu_custom_call.1} parent=39 // pred_fallthru
          _
        // Predicated region
        $region45: #{tpu_custom_call.1} parent=39 // pred_check
          %p239 = pneg %p62
        $region46: #{tpu_custom_call.1} parent=39 // pred_check_branch
          %241 = sbr.rel (%p239) target = $region48
        $region47: #{tpu_custom_call.1} parent=39 // pred_region
          %242 = dma.done [#allocation5], 2048
        $region48: #{tpu_custom_call.1} parent=39 // pred_fallthru
          _
        // Predicated region
        $region49: #{tpu_custom_call.1} parent=39 // pred_check
          %p243 = pneg %p104
        $region50: #{tpu_custom_call.1} parent=39 // pred_check_branch
          %245 = sbr.rel (%p243) target = $region52
        $region51: #{tpu_custom_call.1} parent=39 // pred_region
          %246 = dma.done [#allocation5], 256
        $region52: #{tpu_custom_call.1} parent=39 // pred_fallthru
          _
        %s247 = sand.u32 %s28, 1
        %s248 = scalar_lea.sflag [#allocation3], %s247
        %s249 = sand.u32 %s28, 1
        %s250 = smul.addr %s249, 16
        %s251 = scalar_lea.vmem [#allocation2], %s250
        %p252 = pneg %p41
        %p253 = pneg %p38
        %p254 = pneg %p62
        %p255 = pneg %p59
        %p256 = pneg %p83
        %p257 = pneg %p80
        %p258 = pneg %p104
        %p259 = pneg %p101
        %p260 = pneg %p125
        %p261 = pneg %p122
        %p262 = pneg %p151
        %p263 = pneg %p148
        %p264 = scmp.lt.s32.totalorder %s20, 1
        %s265 = scalar_select %p264, %s20, 1
        %s266 = smul.addr %s265, 3
        %s267 = smul.addr %s266, 8
        %s268 = scalar_lea.vmem %s5, %s267
        %p269 = scmp.lt.s32.totalorder %s20, 1
        %s270 = scalar_select %p269, %s20, 1
        %s271 = smul.addr %s270, 3
        %s272 = smul.addr %s271, 8
        %s273 = scalar_lea.vmem %s5, %s272
        %v275 = vld [vmem:[%s234] sm:$0xff]
        %v276 = vld [vmem:[%s234 + $0x8] sm:$0xff]
        %v277 = vld [vmem:[#allocation4] sm:$0xf]
        %v278 = vld [vmem:[#allocation4 + $0x4] sm:$0xf]
        %v279 = vld [vmem:[#allocation4 + $0x8] sm:$0xf]
        %v280 = vld [vmem:[#allocation4 + $0xc] sm:$0xf]
        %v281 = vld [vmem:[#allocation4 + $0x10] sm:$0xf]
        %v282 = vld [vmem:[#allocation4 + $0x14] sm:$0xf]
        %v283 = vld [vmem:[#allocation4 + $0x18] sm:$0xf]
        %v284 = vld [vmem:[#allocation4 + $0x1c] sm:$0xf]
        %v285 = vld [vmem:[#allocation4 + $0x20] sm:$0xf]
        %v286 = vld [vmem:[#allocation4 + $0x24] sm:$0xf]
        %v287 = vld [vmem:[#allocation4 + $0x28] sm:$0xf]
        %v288 = vld [vmem:[#allocation4 + $0x2c] sm:$0xf]
        %v289 = vld [vmem:[#allocation4 + $0x30] sm:$0xf]
        %v290 = vld [vmem:[#allocation4 + $0x34] sm:$0xf]
        %v291 = vld [vmem:[#allocation4 + $0x38] sm:$0xf]
        %v292 = vld [vmem:[#allocation4 + $0x3c] sm:$0xf]
        %v293 = vld [vmem:[#allocation4 + $0x40] sm:$0xf]
        %v294 = vld [vmem:[#allocation4 + $0x44] sm:$0xf]
        %v295 = vld [vmem:[#allocation4 + $0x48] sm:$0xf]
        %v296 = vld [vmem:[#allocation4 + $0x4c] sm:$0xf]
        %v297 = vld [vmem:[#allocation4 + $0x50] sm:$0xf]
        %v298 = vld [vmem:[#allocation4 + $0x54] sm:$0xf]
        %v299 = vld [vmem:[#allocation4 + $0x58] sm:$0xf]
        %v300 = vld [vmem:[#allocation4 + $0x5c] sm:$0xf]
        %v301 = vld [vmem:[#allocation4 + $0x60] sm:$0xf]
        %v302 = vld [vmem:[#allocation4 + $0x64] sm:$0xf]
        %v303 = vld [vmem:[#allocation4 + $0x68] sm:$0xf]
        %v304 = vld [vmem:[#allocation4 + $0x6c] sm:$0xf]
        %v305 = vld [vmem:[#allocation4 + $0x70] sm:$0xf]
        %v306 = vld [vmem:[#allocation4 + $0x74] sm:$0xf]
        %v307 = vld [vmem:[#allocation4 + $0x78] sm:$0xf]
        %v308 = vld [vmem:[#allocation4 + $0x7c] sm:$0xf]
        %v309 = vld [vmem:[%s2] sm:$0x1]
        %v311 = vlaneseq
        %v312 = vshrl.u32 %v311, 7
        %v313 = vsub.s32 0, %v312
        %v314 = vrot.slane %v309, %v313
        %v318 = vunpack.c.l.b16 %v275
        %v319 = vunpack.c.h.b16 %v275
        %v320 = vunpack.c.l.b16 %v276
        %v321 = vunpack.c.h.b16 %v276
        %v322 = vpack.c.b16 %v320, %v318
        %v323 = vpack.c.b16 %v321, %v319
        %v358 = vunpack.c.l.b16 %v277
        %v359 = vunpack.c.l.b16 %v278
        %v360 = vunpack.c.l.b16 %v279
        %v361 = vunpack.c.l.b16 %v280
        %v362 = vunpack.c.l.b16 %v281
        %v363 = vunpack.c.l.b16 %v282
        %v364 = vunpack.c.l.b16 %v283
        %v365 = vunpack.c.l.b16 %v284
        %v366 = vunpack.c.l.b16 %v285
        %v367 = vunpack.c.l.b16 %v286
        %v368 = vunpack.c.l.b16 %v287
        %v369 = vunpack.c.l.b16 %v288
        %v370 = vunpack.c.l.b16 %v289
        %v371 = vunpack.c.l.b16 %v290
        %v372 = vunpack.c.l.b16 %v291
        %v373 = vunpack.c.l.b16 %v292
        %v374 = vunpack.c.l.b16 %v293
        %v375 = vunpack.c.l.b16 %v294
        %v376 = vunpack.c.l.b16 %v295
        %v377 = vunpack.c.l.b16 %v296
        %v378 = vunpack.c.l.b16 %v297
        %v379 = vunpack.c.l.b16 %v298
        %v380 = vunpack.c.l.b16 %v299
        %v381 = vunpack.c.l.b16 %v300
        %v382 = vunpack.c.l.b16 %v301
        %v383 = vunpack.c.l.b16 %v302
        %v384 = vunpack.c.l.b16 %v303
        %v385 = vunpack.c.l.b16 %v304
        %v386 = vunpack.c.l.b16 %v305
        %v387 = vunpack.c.l.b16 %v306
        %v388 = vunpack.c.l.b16 %v307
        %v389 = vunpack.c.l.b16 %v308
        %v390 = vpack.c.b16 %v359, %v358
        %v391 = vpack.c.b16 %v361, %v360
        %v392 = vpack.c.b16 %v363, %v362
        %v393 = vpack.c.b16 %v365, %v364
        %v394 = vpack.c.b16 %v367, %v366
        %v395 = vpack.c.b16 %v369, %v368
        %v396 = vpack.c.b16 %v371, %v370
        %v397 = vpack.c.b16 %v373, %v372
        %v398 = vpack.c.b16 %v375, %v374
        %v399 = vpack.c.b16 %v377, %v376
        %v400 = vpack.c.b16 %v379, %v378
        %v401 = vpack.c.b16 %v381, %v380
        %v402 = vpack.c.b16 %v383, %v382
        %v403 = vpack.c.b16 %v385, %v384
        %v404 = vpack.c.b16 %v387, %v386
        %v405 = vpack.c.b16 %v389, %v388
        %422 = vmatprep.subr.bf16.mxu0 0
        %423 = vmatpush1.bf16.msra.mxu0 %v390
        %424 = vmatprep.subr.bf16.mxu0 0
        %425 = vmatpush1.bf16.msra.mxu0 %v391
        %426 = vmatprep.subr.bf16.mxu0 0
        %427 = vmatpush1.bf16.msra.mxu0 %v392
        %428 = vmatprep.subr.bf16.mxu0 0
        %429 = vmatpush1.bf16.msra.mxu0 %v393
        %430 = vmatprep.subr.bf16.mxu0 0
        %431 = vmatpush1.bf16.msra.mxu0 %v394
        %432 = vmatprep.subr.bf16.mxu0 0
        %433 = vmatpush1.bf16.msra.mxu0 %v395
        %434 = vmatprep.subr.bf16.mxu0 0
        %435 = vmatpush1.bf16.msra.mxu0 %v396
        %436 = vmatprep.subr.bf16.mxu0 0
        %437 = vmatpush1.bf16.msra.mxu0 %v397
        %438 = vmatprep.subr.bf16.mxu0 0
        %439 = vmatpush1.bf16.msra.mxu0 %v398
        %440 = vmatprep.subr.bf16.mxu0 0
        %441 = vmatpush1.bf16.msra.mxu0 %v399
        %442 = vmatprep.subr.bf16.mxu0 0
        %443 = vmatpush1.bf16.msra.mxu0 %v400
        %444 = vmatprep.subr.bf16.mxu0 0
        %445 = vmatpush1.bf16.msra.mxu0 %v401
        %446 = vmatprep.subr.bf16.mxu0 0
        %447 = vmatpush1.bf16.msra.mxu0 %v402
        %448 = vmatprep.subr.bf16.mxu0 0
        %449 = vmatpush1.bf16.msra.mxu0 %v403
        %450 = vmatprep.subr.bf16.mxu0 0
        %451 = vmatpush1.bf16.msra.mxu0 %v404
        %452 = vmatprep.subr.bf16.mxu0 0
        %453 = vmatpush1.bf16.msra.mxu0 %v405
        %454 = vmatprep.mubr.bf16.mxu0 %v323
        %455 = vmatmul.mubr.bf16.gmra.mrb[0].mxu0 %v322
        %v456 = vpop.f32.mrb[0].mxu0
        %v457 = vadd.f32 %v314, %v456
        %v458 = vpop.f32.mrb[0].mxu0
        %v459 = vpop.f32.mrb[0].mxu0
        %v460 = vadd.f32 %v314, %v459
        %v461 = vpop.f32.mrb[0].mxu0
        %462 = vdwg.mxu0
        %v463 = vld [vmem:[#allocation6] sm:$0xff]
        %v464 = vld [vmem:[#allocation6 + $0x8] sm:$0xff]
        %v465 = vadd.f32 %v457, %v463
        %v466 = vadd.f32 %v460, %v464
        %v467 = vld [vmem:[%s4] sm:$0x1]
        %468 = vst [vmem:[%s273] sm:$0x1] %v467
        %469 = vst [vmem:[%s273 + $0x1] sm:$0xff] %v465
        %470 = vst [vmem:[%s273 + $0x9] sm:$0xff] %v466
        %p471 = scmp.lt.s32.totalorder %s20, 1
        %s472 = scalar_select %p471, %s20, 1
        %s473 = smul.addr %s472, 3
        %s474 = smul.addr %s473, 8
        %s475 = scalar_lea.vmem %s5, %s474
        // Predicated region
        $region53: #{tpu_custom_call.1} parent=39 // pred_check
          %p476 = pneg %p148
        $region54: #{tpu_custom_call.1} parent=39 // pred_check_branch
          %478 = sbr.rel (%p476) target = $region56
        $region55: #{tpu_custom_call.1} parent=39 // pred_region
          _
        $region56: #{tpu_custom_call.1} parent=39 // pred_fallthru
          _
      $region40: #{tpu_custom_call.1} parent=5 // pred_fallthru
        _
      %p479 = scmp.le.s32.totalorder 2, %s15
      // Predicated region
      $region57: #{tpu_custom_call.1} parent=5 // pred_check
        %p480 = pneg %p479
      $region58: #{tpu_custom_call.1} parent=5 // pred_check_branch
        %482 = sbr.rel (%p480) target = $region60
      $region59: #{tpu_custom_call.1} parent=5 // pred_region
        %s483 = ssub.s32 %s15, 2
        // Predicated region
        $region61: #{tpu_custom_call.1} parent=59 // pred_check
          %p484 = pneg %p154
        $region62: #{tpu_custom_call.1} parent=59 // pred_check_branch
          %486 = sbr.rel (%p484) target = $region64
        $region63: #{tpu_custom_call.1} parent=59 // pred_region
          %p487 = scmp.lt.s32.totalorder %s21, 1
          %s488 = scalar_select %p487, %s21, 1
          %s489 = smul.addr %s488, 3
          %s490 = smul.addr %s489, 8
          %s491 = scalar_lea.vmem %s5, %s490
        $region64: #{tpu_custom_call.1} parent=59 // pred_fallthru
          _
      $region60: #{tpu_custom_call.1} parent=5 // pred_fallthru
        _
    $region6: #{tpu_custom_call.1} parent=1 // loop_footer
      %s19 = sadd.s32 1, %s15
    $region7: #{tpu_custom_call.1} parent=1 // loop_footer_branch
      %14 = sbr.rel target = $region3
    $region8: #{tpu_custom_call.1} parent=1 // loop_exit
      _
    %492 = vsyncpa [#allocation3], 1
    %s493 = scalar_lea.sflag [#allocation3], 1
    %494 = vsyncpa %s493, 1
    %495 = vsyncpa [#allocation5], 1

</llo_original>
